<compile_context>
chip_gen: v5e
topology: v5e:2x2
jax: 0.10.0
libtpu: 0.0.40
codegen_flags: <defaults>
</compile_context>

<pallas_src>
import functools
import math

import jax
import jax.numpy as jnp
from jax.experimental import pallas as pl
from jax.experimental.pallas import tpu as pltpu

_LANE = 128


def _rmsnorm_kernel(x_ref, w_ref, o_ref, *, eps, inv_dim):
    # x_ref: (TM, Dp) tile of rows; w_ref: (1, Dp) f32 weight; o_ref: (TM, Dp).
    xf = x_ref[...].astype(jnp.float32)
    # Padded lanes (if any) are zero, so they do not perturb the sum of
    # squares; divide by the *true* hidden dim via inv_dim.
    ms = jnp.sum(xf * xf, axis=-1, keepdims=True) * inv_dim      # (TM, 1) f32
    inv = jax.lax.rsqrt(ms + eps)                                 # (TM, 1) f32

    if x_ref.dtype == jnp.float32:
        # type_as round-trip is an identity for f32 inputs -> fuse directly.
        o_ref[...] = (xf * inv * w_ref[...]).astype(o_ref.dtype)
    else:
        # Match the module bit-exactly for sub-f32 x:
        #   _norm(x.float()).type_as(x), then * weight (computed in f32).
        normed = (xf * inv).astype(x_ref.dtype)
        o_ref[...] = (normed.astype(jnp.float32) * w_ref[...]).astype(o_ref.dtype)


def _chip_config():
    """Return (vmem pipeline budget, vmem_limit_bytes, dual_core) for this chip."""
    vmem_cap = None
    try:
        vmem_cap = getattr(pltpu.get_tpu_info(), "vmem_capacity_bytes", None)
    except Exception:
        vmem_cap = None
    if vmem_cap is not None and vmem_cap >= 96 * 1024 * 1024:
        # v5e / v6e: 128 MiB physical VMEM, single TensorCore per chip.
        return 64 * 1024 * 1024, 96 * 1024 * 1024, False
    # v7x (64 MiB VMEM, 2 TensorCores per chip) or unknown -> conservative.
    return 32 * 1024 * 1024, 48 * 1024 * 1024, True


def _pick_row_tile(rows, dim_p, in_itemsize, out_itemsize, budget, dual_core):
    """Largest row tile that fits the VMEM pipeline budget; avoid row padding."""
    # Sublane packing granularity of the input dtype (8 f32 / 16 bf16 / 32 int8).
    sub = max(8, 32 // max(1, in_itemsize))

    # Pipeline footprint per row: double-buffered input + output tiles plus
    # ~2 f32-wide intermediates (xf and the scaled product).
    per_row = 2 * dim_p * in_itemsize + 2 * dim_p * out_itemsize + 2 * dim_p * 4
    tm_cap = max(sub, (budget // per_row) // sub * sub)

    if dual_core and rows >= 8 * sub:
        # Keep >= ~8 grid steps so the "parallel" axis can shard across v7x's
        # two TensorCores. Skipped on single-TC v5e/v6e where it only shrinks
        # tiles and adds per-step overhead.
        tm_cap = min(tm_cap, max(sub, (rows // 8) // sub * sub))

    if rows % sub == 0:
        top = max(sub, min(tm_cap, rows) // sub * sub)
        best, t = sub, top
        while t >= sub:
            if rows % t == 0:
                best = t
                break
            t -= sub
        if 2 * best >= top:
            # Exact divisor close to the cap: no padding, no masked tail.
            return best, (rows // best,)
        # Awkward factorization: prefer full-size tiles + a masked tail block.
        # (OOB rows in the tail read unspecified data; any transient NaN/Inf
        # is dropped on write and rows are independent, so outputs are valid.)
        return top, (pl.cdiv(rows, top),)

    # Ragged row count (not a multiple of the sublane granularity).
    if dual_core:
        # Split into ~4+ steps so both TensorCores get work and DMA overlaps.
        tm = min(tm_cap, max(sub, pl.cdiv(pl.cdiv(rows, 4), sub) * sub))
        if tm >= rows:
            return rows, (1,)
        return tm, (pl.cdiv(rows, tm),)
    if rows <= tm_cap:
        return rows, (1,)  # single full-rows block (full-extent is layout-legal)
    return tm_cap, (pl.cdiv(rows, tm_cap),)


def luca_rms_norm(x, weight, eps=1e-5):
    """RMSNorm over the last dim of x, scaled by `weight` (shape (dim,))."""
    orig_shape = x.shape
    dim = orig_shape[-1]
    assert weight.shape == (dim,)

    # Output dtype follows torch promotion of `normed.type_as(x) * weight`.
    out_dtype = jnp.result_type(x.dtype, weight.dtype)

    rows = math.prod(orig_shape[:-1]) if len(orig_shape) > 1 else 1
    x2d = x.reshape(rows, dim)
    w_f32 = weight.astype(jnp.float32)

    # Lane-dense layout: pad the hidden dim to a multiple of 128 so stores are
    # unmasked `vst` (padded lanes are zero and are sliced off the output).
    dim_p = pl.cdiv(dim, _LANE) * _LANE
    if dim_p != dim:
        x2d = jnp.pad(x2d, ((0, 0), (0, dim_p - dim)))
        w_f32 = jnp.pad(w_f32, (0, dim_p - dim))
    w2d = w_f32.reshape(1, dim_p)

    in_itemsize = jnp.dtype(x.dtype).itemsize
    out_itemsize = jnp.dtype(out_dtype).itemsize
    budget, vmem_limit, dual_core = _chip_config()
    tm, grid = _pick_row_tile(rows, dim_p, in_itemsize, out_itemsize, budget, dual_core)

    kernel = functools.partial(
        _rmsnorm_kernel, eps=float(eps), inv_dim=1.0 / float(dim)
    )

    out = pl.pallas_call(
        kernel,
        out_shape=jax.ShapeDtypeStruct((rows, dim_p), out_dtype),
        grid_spec=pltpu.PrefetchScalarGridSpec(
            num_scalar_prefetch=0,
            grid=grid,
            in_specs=[
                pl.BlockSpec((tm, dim_p), lambda i: (i, 0)),   # x tile
                pl.BlockSpec((1, dim_p), lambda i: (0, 0)),    # weight (resident)
            ],
            out_specs=pl.BlockSpec((tm, dim_p), lambda i: (i, 0)),
        ),
        compiler_params=pltpu.CompilerParams(
            dimension_semantics=("parallel",),
            # Explicit scoped-VMEM limit so the large tiles are not blocked by
            # the 16/32 MiB defaults; sized per generation in _chip_config.
            vmem_limit_bytes=vmem_limit,
        ),
        cost_estimate=pl.CostEstimate(
            flops=4 * rows * dim,
            transcendentals=rows,
            bytes_accessed=rows * dim * (in_itemsize + out_itemsize) + dim * 4,
        ),
    )(x2d, w2d)

    if dim_p != dim:
        out = out[:, :dim]
    return out.reshape(orig_shape)


def _reference_rms_norm(x, weight, eps):
    xf = x.astype(jnp.float32)
    ms = jnp.mean(xf * xf, axis=-1, keepdims=True)
    normed = (xf * jax.lax.rsqrt(ms + eps)).astype(x.dtype)
    out_dtype = jnp.result_type(x.dtype, weight.dtype)
    return (normed.astype(jnp.float32) * weight.astype(jnp.float32)).astype(out_dtype)


if __name__ == "__main__":
    key = jax.random.PRNGKey(0)
    eps = 1e-5
    k1, k2, k3, k4 = jax.random.split(key, 4)

    # Case 1: typical layout — (batch, seq, hidden) with hidden % 128 == 0.
    batch, seq, hidden = 2, 8, 128
    x = jax.random.normal(k1, (batch, seq, hidden), dtype=jnp.float32)
    weight = jnp.ones((hidden,), jnp.float32) + 0.01 * jax.random.normal(
        k2, (hidden,), jnp.float32
    )
    y = jax.block_until_ready(luca_rms_norm(x, weight, eps))
    y_ref = _reference_rms_norm(x, weight, eps)
    assert y.shape == x.shape and y.dtype == y_ref.dtype
    assert jnp.allclose(y, y_ref, atol=1e-5, rtol=1e-5)

    # Case 2: hidden not a multiple of 128 exercises the lane-padding path.
    hidden2 = 96
    x2 = jax.random.normal(k3, (batch, seq, hidden2), dtype=jnp.float32)
    w2 = jnp.ones((hidden2,), jnp.float32) + 0.01 * jax.random.normal(
        k4, (hidden2,), jnp.float32
    )
    y2 = jax.block_until_ready(luca_rms_norm(x2, w2, eps))
    y2_ref = _reference_rms_norm(x2, w2, eps)
    assert y2.shape == x2.shape
    assert jnp.allclose(y2, y2_ref, atol=1e-5, rtol=1e-5)

    print("KERNEL_OK")
</pallas_src>

<mosaic_0001>
module attributes {stable_mosaic.version = 11 : i64} {
  func.func @_rmsnorm_kernel(%arg0: i32, %arg1: memref<16x128xf32, #tpu.memory_space<vmem>>, %arg2: memref<1x128xf32, #tpu.memory_space<vmem>>, %arg3: memref<16x128xf32, #tpu.memory_space<vmem>>) attributes {dimension_semantics = [#tpu.dimension_semantics<parallel>], iteration_bounds = array<i64: 1>, scalar_prefetch = 0 : i64, scratch_operands = 0 : i64, tpu.core_type = #tpu.core_type<tc>, window_params = [{transform_indices = @transform_0, window_bounds = array<i64: 16, 128>}, {pipeline_mode = #tpu.pipeline_mode<synchronous>, transform_indices = @transform_1, window_bounds = array<i64: 1, 128>}, {transform_indices = @transform_2, window_bounds = array<i64: 16, 128>}]} {
    %c0 = arith.constant 0 : index
    %c0_0 = arith.constant 0 : index
    %0 = vector.load %arg1[%c0, %c0_0] : memref<16x128xf32, #tpu.memory_space<vmem>>, vector<16x128xf32>
    %1 = arith.mulf %0, %0 : vector<16x128xf32>
    %cst = arith.constant dense<0.000000e+00> : vector<16xf32>
    %2 = vector.multi_reduction <add>, %1, %cst [1] : vector<16x128xf32> to vector<16xf32>
    %3 = vector.shape_cast %2 : vector<16xf32> to vector<16x1xf32>
    %cst_1 = arith.constant 7.812500e-03 : f32
    %4 = vector.broadcast %cst_1 : f32 to vector<16x1xf32>
    %5 = arith.mulf %3, %4 : vector<16x1xf32>
    %cst_2 = arith.constant 9.99999974E-6 : f32
    %6 = vector.broadcast %cst_2 : f32 to vector<16x1xf32>
    %7 = arith.addf %5, %6 : vector<16x1xf32>
    %8 = math.rsqrt %7 : vector<16x1xf32>
    %9 = vector.broadcast %8 : vector<16x1xf32> to vector<16x128xf32>
    %10 = arith.mulf %0, %9 : vector<16x128xf32>
    %c0_3 = arith.constant 0 : index
    %c0_4 = arith.constant 0 : index
    %11 = vector.load %arg2[%c0_3, %c0_4] : memref<1x128xf32, #tpu.memory_space<vmem>>, vector<1x128xf32>
    %12 = vector.broadcast %11 : vector<1x128xf32> to vector<16x128xf32>
    %13 = arith.mulf %10, %12 : vector<16x128xf32>
    %c0_5 = arith.constant 0 : index
    %c0_6 = arith.constant 0 : index
    %14 = vector.load %arg3[%c0_5, %c0_6] : memref<16x128xf32, #tpu.memory_space<vmem>>, vector<16x128xf32>
    tpu.vector_store %arg3[%c0_5, %c0_6], %13 {strides = array<i32>} : memref<16x128xf32, #tpu.memory_space<vmem>>, vector<16x128xf32>,
    return
  }
  func.func @transform_0(%arg0: i32) -> (i32, i32) {
    %c0_i32 = arith.constant 0 : i32
    %c0_i32_0 = arith.constant 0 : i32
    return %arg0, %c0_i32 : i32, i32
  }
  func.func @transform_1(%arg0: i32) -> (i32, i32) {
    %c0_i32 = arith.constant 0 : i32
    %c0_i32_0 = arith.constant 0 : i32
    %c0_i32_1 = arith.constant 0 : i32
    return %c0_i32, %c0_i32_0 : i32, i32
  }
  func.func @transform_2(%arg0: i32) -> (i32, i32) {
    %c0_i32 = arith.constant 0 : i32
    %c0_i32_0 = arith.constant 0 : i32
    return %arg0, %c0_i32 : i32, i32
  }
}

</mosaic_0001>

<llo_original>
// kernel: tpu_custom_call.1
$region0: #{tpu_custom_call.1}
  #allocation0 [shape = 'u32[]', space=smem, size = 0x4, offset = 0x4, fixed_abs, tag = 'smem constant byte address 0x4 - core index']
  #allocation1 [shape = 'u32[72,128]{1,0:T(1,128)}', space=vmem, size = 0x9000, scoped, tag = 'internal scratch']
  %s0 = inlined_call_operand.hbm [shape: f32[16,128], index: 0, kind: input, shape index: {}]
  %s1 = inlined_call_operand.hbm [shape: f32[1,128], index: 1, kind: input, shape index: {}]
  %s2 = inlined_call_operand.hbm [shape: f32[16,128], index: 2, kind: output, shape index: {}]
  %s3 = sld [smem:[#allocation0]]
  $region26: #{tpu_custom_call.1} parent=0
    _
  %s5 = ssub.s32 1, %s3
  %s6 = scalar_select 0, %s5, %s3
  $region1: #{tpu_custom_call.1} parent=0
    #allocation2 [shape = 'u8[8192]{0}', space=vmem, size = 0x2000, scoped, tag = 'input window, operand 0, single buffered']
    #allocation3 [shape = 's32[1]{0}', space=sflag, size = 0x4, scoped, tag = 'scoped memory for tpu_custom_call.1']
    #allocation4 [shape = 's32[1]{0}', space=sflag, size = 0x4, scoped, tag = 'scoped memory for tpu_custom_call.1']
    #allocation5 [shape = 'u8[512]{0}', space=vmem, size = 0x400, scoped, tag = 'input window, operand 1, single buffered']
    #allocation6 [shape = 's32[1]{0}', space=sflag, size = 0x4, scoped, tag = 'scoped memory for tpu_custom_call.1']
    #allocation7 [shape = 'u8[8192]{0}', space=vmem, size = 0x2000, scoped, tag = 'output window, operand 0, single buffered']
    %7 = vsyncpa [#allocation3], 0
    %8 = vsyncpa [#allocation6], 0
    %9 = vsyncpa [#allocation4], 0
    // Predicated region
    $region2: #{tpu_custom_call.1} parent=1 // pred_check
      _
    $region3: #{tpu_custom_call.1} parent=1 // pred_check_branch
      %11 = sbr.rel (0) target = $region5
    $region4: #{tpu_custom_call.1} parent=1 // pred_region
      %13 = vsyncadd [#allocation3], 0
      %s14 = sshll.u32 %s0, 4
      %s15 = int_to_ptr.hbm [resolvable:$true] %s14
      %s16 = sshll.u32 [#allocation2], 4
      %s17 = int_to_ptr.vmem [resolvable:$true] %s16
      %22 = dma.hbm_to_vmem [thread:$0]  %s15, 256, %s17, [#allocation3], 128, 128, 8
    $region5: #{tpu_custom_call.1} parent=1 // pred_fallthru
      _
    // Predicated region
    $region6: #{tpu_custom_call.1} parent=1 // pred_check
      _
    $region7: #{tpu_custom_call.1} parent=1 // pred_check_branch
      %24 = sbr.rel (0) target = $region9
    $region8: #{tpu_custom_call.1} parent=1 // pred_region
      %26 = vsyncadd [#allocation6], 0
      %s28 = sshll.u32 %s1, 4
      %s29 = int_to_ptr.hbm [resolvable:$true] %s28
      %s30 = sshll.u32 [#allocation5], 4
      %s31 = int_to_ptr.vmem [resolvable:$true] %s30
      %33 = dma.hbm_to_vmem [thread:$0]  %s29, 16, %s31, [#allocation6]
    $region9: #{tpu_custom_call.1} parent=1 // pred_fallthru
      _
    // Predicated region
    $region10: #{tpu_custom_call.1} parent=1 // pred_check
      _
    $region11: #{tpu_custom_call.1} parent=1 // pred_check_branch
      %35 = sbr.rel (0) target = $region13
    $region12: #{tpu_custom_call.1} parent=1 // pred_region
      %37 = dma.done [#allocation3], 256
    $region13: #{tpu_custom_call.1} parent=1 // pred_fallthru
      _
    // Predicated region
    $region14: #{tpu_custom_call.1} parent=1 // pred_check
      _
    $region15: #{tpu_custom_call.1} parent=1 // pred_check_branch
      %39 = sbr.rel (0) target = $region17
    $region16: #{tpu_custom_call.1} parent=1 // pred_region
      %41 = dma.done [#allocation6], 16
    $region17: #{tpu_custom_call.1} parent=1 // pred_fallthru
      _
    %v42 = vld [vmem:[#allocation2] sm:$0xff]
    %v43 = vld [vmem:[#allocation2 + $0x8] sm:$0xff]
    %v44 = vmul.f32 %v42, %v42
    %v45 = vmul.f32 %v43, %v43
    %46 = vadd.xlane.f32.xlu0 %v44
    %v47 = vpop.xlane.xlu0 %46
    %48 = vadd.xlane.f32.xlu0 %v45
    %v49 = vpop.xlane.xlu0 %48
    %v50 = vmul.f32 %v47, 0.0078125
    %v51 = vmul.f32 %v49, 0.0078125
    %v52 = vadd.f32 %v50, 1e-05
    %v53 = vadd.f32 %v51, 1e-05
    %v54 = vrsqrt.pop %v52
    %v55 = vmul.f32 %v54, %v52
    %v56 = vmul.f32 %v55, %v54
    %v57 = vmul.f32 0.5, %v56
    %v58 = vsub.f32 1.5, %v57
    %v59 = vmul.f32 %v54, %v58
    %vm60 = vweird.f32 %v52
    %vm61 = vweird.f32 %v54
    %vm62 = vmor %vm60, %vm61
    %v63 = vsel %vm62, %v54, %v59
    %v64 = vrsqrt.pop %v53
    %v65 = vmul.f32 %v64, %v53
    %v66 = vmul.f32 %v65, %v64
    %v67 = vmul.f32 0.5, %v66
    %v68 = vsub.f32 1.5, %v67
    %v69 = vmul.f32 %v64, %v68
    %vm70 = vweird.f32 %v53
    %vm71 = vweird.f32 %v64
    %vm72 = vmor %vm70, %vm71
    %v73 = vsel %vm72, %v64, %v69
    %v74 = vmul.f32 %v42, %v63
    %v75 = vmul.f32 %v43, %v73
    %v76 = vld [vmem:[#allocation5] sm:$0x1]
    %v78 = vperm.slane %v76, 0
    %v80 = vmul.f32 %v74, %v78
    %v81 = vmul.f32 %v75, %v78
    %82 = vst [vmem:[#allocation7] sm:$0xff] %v80
    %83 = vst [vmem:[#allocation7 + $0x8] sm:$0xff] %v81
    // Predicated region
    $region18: #{tpu_custom_call.1} parent=1 // pred_check
      _
    $region19: #{tpu_custom_call.1} parent=1 // pred_check_branch
      %85 = sbr.rel (0) target = $region21
    $region20: #{tpu_custom_call.1} parent=1 // pred_region
      %87 = vsyncadd [#allocation4], 0
      %s88 = sshll.u32 [#allocation7], 4
      %s89 = int_to_ptr.vmem [resolvable:$true] %s88
      %s90 = sshll.u32 %s2, 4
      %s91 = int_to_ptr.hbm [resolvable:$true] %s90
      %96 = dma.vmem_to_hbm [thread:$0]  %s89, 256, %s91, [#allocation4], 128, 128, 8
    $region21: #{tpu_custom_call.1} parent=1 // pred_fallthru
      _
    // Predicated region
    $region22: #{tpu_custom_call.1} parent=1 // pred_check
      _
    $region23: #{tpu_custom_call.1} parent=1 // pred_check_branch
      %98 = sbr.rel (0) target = $region25
    $region24: #{tpu_custom_call.1} parent=1 // pred_region
      %100 = dma.done [#allocation4], 256
    $region25: #{tpu_custom_call.1} parent=1 // pred_fallthru
      _
    %101 = vsyncpa [#allocation3], 1
    %102 = vsyncpa [#allocation6], 1
    %103 = vsyncpa [#allocation4], 1

</llo_original>
